<compile_context>
chip_gen: v7x
topology: tpu7x:2x2x1
jax: 0.10.0
libtpu: 0.0.40
codegen_flags: <defaults>
</compile_context>

<pallas_src>
import jax
import jax.numpy as jnp
from jax.experimental import pallas as pl
from jax.experimental.pallas import tpu as pltpu

# Deterministic sigmas — "test" branch of add_noise().
SIG_SHOT = (0.01 - 0.0001) / 2.0   # 0.00495
SIG_READ = (0.03 - 0.001) / 2.0    # 0.0145

# Largest spatial tile (in flattened H*W elements). Per-step VMEM working set
# is ~2 * (T + 2) * tile * 4 bytes ≈ 5 MiB at tile = 65536 — comfortably
# inside the 32 MiB scoped default on every generation (incl. v7x's 64 MiB).
_MAX_TILE = 64 * 1024


def long_shutter_kernel(x_ref, noise_ref, o_ref):
    # x_ref:     VMEM (1, T, tile) float32 — T video frames for one batch tile
    # noise_ref: VMEM (1, 1, tile) float32 — standard-normal field
    # o_ref:     VMEM (1, 1, tile) float32 — noisy, clamped long exposure
    frame_sum = jnp.sum(x_ref[0], axis=0, keepdims=True)      # (1, tile)
    img = frame_sum * 0.125                                    # sum/8 * (8/8)
    # shot + read noise combined: N(0, img*sig_shot^2 + sig_read^2)
    sigma = jnp.sqrt(img * (SIG_SHOT * SIG_SHOT) + SIG_READ * SIG_READ)
    noisy = img + noise_ref[0] * sigma
    o_ref[0] = jnp.clip(noisy, 0.0, 1.0)


def long_shutter(video_block, noise=None, key=None):
    """video_block: (B, T, H, W) float32, T == 8. Returns (B, 1, H, W)."""
    B, T, H, W = video_block.shape
    N = H * W

    if noise is None:
        if key is None:
            key = jax.random.PRNGKey(0)
        noise = jax.random.normal(key, (B, 1, H, W), dtype=jnp.float32)

    # Lane-dense flattening (free metadata reshape for contiguous NCHW).
    x_flat = video_block.reshape(B, T, N)
    noise_flat = noise.reshape(B, 1, N)

    # Tile selection: multiple of 128 lanes (or the full extent for small /
    # odd-sized images, which also satisfies the tiling rule).
    if N % 128 == 0:
        tile = min(N, _MAX_TILE)
    else:
        tile = N
    num_tiles = pl.cdiv(N, tile)

    out_flat = pl.pallas_call(
        long_shutter_kernel,
        out_shape=jax.ShapeDtypeStruct((B, 1, N), jnp.float32),
        grid=(B, num_tiles),
        in_specs=[
            pl.BlockSpec((1, T, tile), lambda b, n: (b, 0, n)),
            pl.BlockSpec((1, 1, tile), lambda b, n: (b, 0, n)),
        ],
        out_specs=pl.BlockSpec((1, 1, tile), lambda b, n: (b, 0, n)),
        compiler_params=pltpu.CompilerParams(
            dimension_semantics=("parallel", "parallel"),
        ),
    )(x_flat, noise_flat)

    return out_flat.reshape(B, 1, H, W)


if __name__ == "__main__":
    key = jax.random.PRNGKey(0)
    data_key, noise_key = jax.random.split(key)

    B, T, H, W = 2, 8, 16, 16
    # Video intensities in [0, 1] (non-negative, as sqrt() expects).
    video_block = jax.random.uniform(data_key, (B, T, H, W), dtype=jnp.float32)
    noise = jax.random.normal(noise_key, (B, 1, H, W), dtype=jnp.float32)

    out = long_shutter(video_block, noise=noise)
    out = jax.block_until_ready(out)

    # Pure-JAX reference with the exact same noise field.
    img_ref = jnp.sum(video_block, axis=1, keepdims=True) / 8.0
    sigma_ref = jnp.sqrt(img_ref * (SIG_SHOT * SIG_SHOT) + SIG_READ * SIG_READ)
    expected = jnp.clip(img_ref + noise * sigma_ref, 0.0, 1.0)

    assert out.shape == (B, 1, H, W), out.shape
    assert out.dtype == jnp.float32
    assert bool(jnp.all(out >= 0.0)) and bool(jnp.all(out <= 1.0))
    assert bool(jnp.allclose(out, expected, rtol=1e-5, atol=1e-5))
    print("KERNEL_OK")
</pallas_src>

<mosaic_0001>
module attributes {stable_mosaic.version = 11 : i64} {
  func.func @long_shutter_kernel(%arg0: i32, %arg1: i32, %arg2: memref<1x8x256xf32, #tpu.memory_space<vmem>>, %arg3: memref<1x1x256xf32, #tpu.memory_space<vmem>>, %arg4: memref<1x1x256xf32, #tpu.memory_space<vmem>>) attributes {dimension_semantics = [#tpu.dimension_semantics<parallel>, #tpu.dimension_semantics<parallel>], iteration_bounds = array<i64: 2, 1>, scalar_prefetch = 0 : i64, scratch_operands = 0 : i64, tpu.core_type = #tpu.core_type<tc>, window_params = [{transform_indices = @transform_0, window_bounds = array<i64: 1, 8, 256>}, {transform_indices = @transform_1, window_bounds = array<i64: 1, 1, 256>}, {transform_indices = @transform_2, window_bounds = array<i64: 1, 1, 256>}]} {
    %c0 = arith.constant 0 : index
    %c0_0 = arith.constant 0 : index
    %c0_1 = arith.constant 0 : index
    %0 = vector.load %arg2[%c0, %c0_0, %c0_1] : memref<1x8x256xf32, #tpu.memory_space<vmem>>, vector<1x8x256xf32>
    %1 = vector.shape_cast %0 : vector<1x8x256xf32> to vector<8x256xf32>
    %cst = arith.constant dense<0.000000e+00> : vector<256xf32>
    %2 = vector.multi_reduction <add>, %1, %cst [0] : vector<8x256xf32> to vector<256xf32>
    %3 = vector.shape_cast %2 : vector<256xf32> to vector<1x256xf32>
    %cst_2 = arith.constant 1.250000e-01 : f32
    %4 = vector.broadcast %cst_2 : f32 to vector<1x256xf32>
    %5 = arith.mulf %3, %4 : vector<1x256xf32>
    %cst_3 = arith.constant 2.450250e-05 : f32
    %6 = vector.broadcast %cst_3 : f32 to vector<1x256xf32>
    %7 = arith.mulf %5, %6 : vector<1x256xf32>
    %cst_4 = arith.constant 2.102500e-04 : f32
    %8 = vector.broadcast %cst_4 : f32 to vector<1x256xf32>
    %9 = arith.addf %7, %8 : vector<1x256xf32>
    %10 = math.sqrt %9 : vector<1x256xf32>
    %c0_5 = arith.constant 0 : index
    %c0_6 = arith.constant 0 : index
    %c0_7 = arith.constant 0 : index
    %11 = vector.load %arg3[%c0_5, %c0_6, %c0_7] : memref<1x1x256xf32, #tpu.memory_space<vmem>>, vector<1x1x256xf32>
    %12 = vector.shape_cast %11 : vector<1x1x256xf32> to vector<1x256xf32>
    %13 = arith.mulf %12, %10 : vector<1x256xf32>
    %14 = arith.addf %5, %13 : vector<1x256xf32>
    %cst_8 = arith.constant 0.000000e+00 : f32
    %cst_9 = arith.constant 1.000000e+00 : f32
    %15 = vector.broadcast %cst_8 : f32 to vector<1x256xf32>
    %16 = arith.maximumf %15, %14 : vector<1x256xf32>
    %17 = vector.broadcast %cst_9 : f32 to vector<1x256xf32>
    %18 = arith.minimumf %17, %16 : vector<1x256xf32>
    %c0_10 = arith.constant 0 : index
    %c0_11 = arith.constant 0 : index
    %c0_12 = arith.constant 0 : index
    %19 = vector.load %arg4[%c0_10, %c0_11, %c0_12] : memref<1x1x256xf32, #tpu.memory_space<vmem>>, vector<1x1x256xf32>
    %20 = vector.shape_cast %19 : vector<1x1x256xf32> to vector<1x256xf32>
    %21 = vector.shape_cast %18 : vector<1x256xf32> to vector<1x1x256xf32>
    tpu.vector_store %arg4[%c0_10, %c0_11, %c0_12], %21 {strides = array<i32>} : memref<1x1x256xf32, #tpu.memory_space<vmem>>, vector<1x1x256xf32>,
    return
  }
  func.func @transform_0(%arg0: i32, %arg1: i32) -> (i32, i32, i32) {
    %c0_i32 = arith.constant 0 : i32
    %c0_i32_0 = arith.constant 0 : i32
    return %arg0, %c0_i32, %arg1 : i32, i32, i32
  }
  func.func @transform_1(%arg0: i32, %arg1: i32) -> (i32, i32, i32) {
    %c0_i32 = arith.constant 0 : i32
    %c0_i32_0 = arith.constant 0 : i32
    return %arg0, %c0_i32, %arg1 : i32, i32, i32
  }
  func.func @transform_2(%arg0: i32, %arg1: i32) -> (i32, i32, i32) {
    %c0_i32 = arith.constant 0 : i32
    %c0_i32_0 = arith.constant 0 : i32
    return %arg0, %c0_i32, %arg1 : i32, i32, i32
  }
}

</mosaic_0001>

<llo_original>
// kernel: tpu_custom_call.1
$region0: #{tpu_custom_call.1}
  #allocation0 [shape = 'u32[]', space=smem, size = 0x4, offset = 0x4, fixed_abs, tag = 'smem constant byte address 0x4 - core index']
  #allocation1 [shape = 'u32[144,128]{1,0:T(1,128)}', space=vmem, size = 0x12000, scoped, tag = 'internal scratch']
  %s0 = inlined_call_operand.hbm [shape: f32[2,8,256], index: 0, kind: input, shape index: {}]
  %s1 = inlined_call_operand.hbm [shape: f32[2,1,256], index: 1, kind: input, shape index: {}]
  %s2 = inlined_call_operand.hbm [shape: f32[2,1,256], index: 2, kind: output, shape index: {}]
  %s3 = sld [smem:[#allocation0]]
  $region49: #{tpu_custom_call.1} parent=0
    _
  %s5 = ssub.s32 1, %s3
  %s6 = scalar_select 0, %s5, %s3
  $region1: #{tpu_custom_call.1} parent=0
    #allocation2 [shape = 'u8[16384]{0}', space=vmem, size = 0x4000, scoped, tag = 'input window, operand 0']
    #allocation3 [shape = 's32[2]{0}', space=sflag, size = 0x8, scoped, tag = 'scoped memory for tpu_custom_call.1']
    #allocation4 [shape = 's32[2]{0}', space=sflag, size = 0x8, scoped, tag = 'scoped memory for tpu_custom_call.1']
    #allocation5 [shape = 'u8[2048]{0}', space=vmem, size = 0x800, scoped, tag = 'input window, operand 1']
    #allocation6 [shape = 's32[2]{0}', space=sflag, size = 0x8, scoped, tag = 'scoped memory for tpu_custom_call.1']
    #allocation7 [shape = 'u8[2048]{0}', space=vmem, size = 0x800, scoped, tag = 'output window, operand 0']
    %7 = vsyncpa [#allocation3], 0
    %s8 = scalar_lea.sflag [#allocation3], 1
    %9 = vsyncpa %s8, 0
    %10 = vsyncpa [#allocation6], 0
    %s11 = scalar_lea.sflag [#allocation6], 1
    %12 = vsyncpa %s11, 0
    %13 = vsyncpa [#allocation4], 0
    %s14 = scalar_lea.sflag [#allocation4], 1
    %15 = vsyncpa %s14, 0
    loop: start=0, step=1, limit=4
    $region2: #{tpu_custom_call.1} parent=1 // loop_pre_header
      _
    $region3: #{tpu_custom_call.1} parent=1 // loop_header
      %s17 = sphi 0, %s21
      %p18 = scmp.ge.s32.totalorder %s17, 4
      %s24 = sphi 0, %s36
      %s25 = sphi 0, %s32
      %s26 = sphi 0, %s24
      %s27 = sphi 0, %s25
      %s28 = sphi 0, %s26
      %s29 = sphi 0, %s27
      %s41 = sphi 0, %s43
      %s44 = sphi 0, %s41
      %s45 = sphi 0, %s44
      %s61 = sphi 0, %s45
      %s69 = sphi 0, %s71
      %s72 = sphi 0, %s69
      %s73 = sphi 0, %s72
      %s89 = sphi 0, %s73
      %s97 = sphi 0, %s99
      %s100 = sphi 0, %s97
      %s101 = sphi 0, %s100
      %s117 = sphi 0, %s101
    $region4: #{tpu_custom_call.1} parent=1 // loop_header_branch
      %20 = sbr.rel (%p18) target = $region8
    $region5: #{tpu_custom_call.1} parent=1 // loop_body
      %s22 = ssub.s32 %s17, 1
      %s23 = ssub.s32 %s17, 2
      %s30 = sadd.s32 1, %s25
      %p31 = scmp.ge.s32.totalorder %s30, 1
      %s32 = scalar_select %p31, 0, %s30
      %s33 = sadd.s32 1, %s24
      %s34 = scalar_select %p31, %s33, %s24
      %p35 = scmp.ge.s32.totalorder %s34, 2
      %s36 = scalar_select %p35, 0, %s34
      %s37 = ssub.s32 %s24, %s36
      %s38 = ssub.s32 %s25, %s32
      %s39 = sor.u32 %s37, %s38
      %p40 = scmp.eq.s32.totalorder %s39, 0
      %s42 = sadd.s32 %s41, 1
      %s43 = scalar_select %p40, %s41, %s42
      %p46 = pneg %p40
      %p47 = scmp.eq.s32.totalorder %s17, 1
      %p48 = por %p46, %p47
      %p49 = scmp.ne.s32.totalorder %s41, %s44
      %p50 = scmp.eq.s32.totalorder %s17, 0
      %p51 = por %p49, %p50
      %p52 = scmp.ne.s32.totalorder %s41, %s44
      %p53 = scmp.eq.s32.totalorder %s22, 1
      %p54 = por %p52, %p53
      %p55 = scmp.ne.s32.totalorder %s44, %s45
      %p56 = scmp.eq.s32.totalorder %s22, 0
      %p57 = por %p55, %p56
      %p58 = scmp.ne.s32.totalorder %s44, %s45
      %p59 = scmp.eq.s32.totalorder %s23, 1
      %p60 = por %p58, %p59
      %p62 = scmp.ne.s32.totalorder %s45, %s61
      %p63 = scmp.eq.s32.totalorder %s23, 0
      %p64 = por %p62, %p63
      %s65 = ssub.s32 %s24, %s36
      %s66 = ssub.s32 %s25, %s32
      %s67 = sor.u32 %s65, %s66
      %p68 = scmp.eq.s32.totalorder %s67, 0
      %s70 = sadd.s32 %s69, 1
      %s71 = scalar_select %p68, %s69, %s70
      %p74 = pneg %p68
      %p75 = scmp.eq.s32.totalorder %s17, 1
      %p76 = por %p74, %p75
      %p77 = scmp.ne.s32.totalorder %s69, %s72
      %p78 = scmp.eq.s32.totalorder %s17, 0
      %p79 = por %p77, %p78
      %p80 = scmp.ne.s32.totalorder %s69, %s72
      %p81 = scmp.eq.s32.totalorder %s22, 1
      %p82 = por %p80, %p81
      %p83 = scmp.ne.s32.totalorder %s72, %s73
      %p84 = scmp.eq.s32.totalorder %s22, 0
      %p85 = por %p83, %p84
      %p86 = scmp.ne.s32.totalorder %s72, %s73
      %p87 = scmp.eq.s32.totalorder %s23, 1
      %p88 = por %p86, %p87
      %p90 = scmp.ne.s32.totalorder %s73, %s89
      %p91 = scmp.eq.s32.totalorder %s23, 0
      %p92 = por %p90, %p91
      %s93 = ssub.s32 %s24, %s36
      %s94 = ssub.s32 %s25, %s32
      %s95 = sor.u32 %s93, %s94
      %p96 = scmp.eq.s32.totalorder %s95, 0
      %s98 = sadd.s32 %s97, 1
      %s99 = scalar_select %p96, %s97, %s98
      %p102 = pneg %p96
      %p103 = scmp.eq.s32.totalorder %s17, 1
      %p104 = por %p102, %p103
      %p105 = scmp.ne.s32.totalorder %s97, %s100
      %p106 = scmp.eq.s32.totalorder %s17, 0
      %p107 = por %p105, %p106
      %p108 = scmp.ne.s32.totalorder %s97, %s100
      %p109 = scmp.eq.s32.totalorder %s22, 1
      %p110 = por %p108, %p109
      %p111 = scmp.ne.s32.totalorder %s100, %s101
      %p112 = scmp.eq.s32.totalorder %s22, 0
      %p113 = por %p111, %p112
      %p114 = scmp.ne.s32.totalorder %s100, %s101
      %p115 = scmp.eq.s32.totalorder %s23, 1
      %p116 = por %p114, %p115
      %p118 = scmp.ne.s32.totalorder %s101, %s117
      %p119 = scmp.eq.s32.totalorder %s23, 0
      %p120 = por %p118, %p119
      %p121 = scmp.le.s32.totalorder 1, %s17
      %p122 = scmp.lt.s32.totalorder %s17, 3
      %p123 = pnand %p121, %p122
      %p124 = pneg %p123
      // Predicated region
      $region9: #{tpu_custom_call.1} parent=5 // pred_check
        _
      $region10: #{tpu_custom_call.1} parent=5 // pred_check_branch
        %126 = sbr.rel (%p123) target = $region12
      $region11: #{tpu_custom_call.1} parent=5 // pred_region
        %s127 = ssub.s32 %s17, 1
      $region12: #{tpu_custom_call.1} parent=5 // pred_fallthru
        _
      %p128 = scmp.lt.s32.totalorder %s17, 2
      // Predicated region
      $region13: #{tpu_custom_call.1} parent=5 // pred_check
        %p129 = pneg %p128
      $region14: #{tpu_custom_call.1} parent=5 // pred_check_branch
        %131 = sbr.rel (%p129) target = $region16
      $region15: #{tpu_custom_call.1} parent=5 // pred_region
        // Predicated region
        $region17: #{tpu_custom_call.1} parent=15 // pred_check
          %p132 = pneg %p51
        $region18: #{tpu_custom_call.1} parent=15 // pred_check_branch
          %134 = sbr.rel (%p132) target = $region20
        $region19: #{tpu_custom_call.1} parent=15 // pred_region
          %s135 = sand.u32 %s41, 1
          %s136 = scalar_lea.sflag [#allocation3], %s135
          %s137 = sand.u32 %s41, 1
          %s138 = smul.addr %s137, 16
          %s139 = scalar_lea.vmem [#allocation2], %s138
          %s140 = smul.u32 2, %s25
          %s142 = ssub.s32 256, 256
          %143 = vsyncadd %s136, %s142
          %s144 = smul.addr %s24, 2
          %s145 = sadd.s32 %s140, %s144
          %s146 = smul.addr %s145, 128
          %s147 = scalar_lea.hbm %s0, %s146
          %s149 = sshll.u32 %s139, 4
          %s150 = int_to_ptr.vmem [resolvable:$true] %s149
          %152 = dma.hbm_to_vmem [thread:$0]  %s147, 256, %s150, %s136
        $region20: #{tpu_custom_call.1} parent=15 // pred_fallthru
          _
        // Predicated region
        $region21: #{tpu_custom_call.1} parent=15 // pred_check
          %p153 = pneg %p79
        $region22: #{tpu_custom_call.1} parent=15 // pred_check_branch
          %155 = sbr.rel (%p153) target = $region24
        $region23: #{tpu_custom_call.1} parent=15 // pred_region
          %s156 = sand.u32 %s69, 1
          %s157 = scalar_lea.sflag [#allocation6], %s156
          %s158 = sand.u32 %s69, 1
          %s159 = smul.addr %s158, 2
          %s160 = scalar_lea.vmem [#allocation5], %s159
          %s161 = smul.u32 2, %s25
          %s163 = ssub.s32 32, 32
          %164 = vsyncadd %s157, %s163
          %s165 = smul.addr %s24, 2
          %s166 = sadd.s32 %s161, %s165
          %s167 = smul.addr %s166, 16
          %s168 = scalar_lea.hbm %s1, %s167
          %s170 = sshll.u32 %s160, 4
          %s171 = int_to_ptr.vmem [resolvable:$true] %s170
          %173 = dma.hbm_to_vmem [thread:$0]  %s168, 32, %s171, %s157
        $region24: #{tpu_custom_call.1} parent=15 // pred_fallthru
          _
      $region16: #{tpu_custom_call.1} parent=5 // pred_fallthru
        _
      %p174 = scmp.le.s32.totalorder 1, %s17
      %p175 = scmp.lt.s32.totalorder %s17, 3
      %p176 = pnand %p174, %p175
      %p177 = pneg %p176
      // Predicated region
      $region25: #{tpu_custom_call.1} parent=5 // pred_check
        _
      $region26: #{tpu_custom_call.1} parent=5 // pred_check_branch
        %179 = sbr.rel (%p176) target = $region28
      $region27: #{tpu_custom_call.1} parent=5 // pred_region
        %s180 = ssub.s32 %s17, 1
        %s181 = sand.u32 %s44, 1
        %s182 = scalar_lea.sflag [#allocation3], %s181
        %s183 = sand.u32 %s44, 1
        %s184 = smul.addr %s183, 16
        %s185 = scalar_lea.vmem [#allocation2], %s184
        // Predicated region
        $region29: #{tpu_custom_call.1} parent=27 // pred_check
          %p186 = pneg %p57
        $region30: #{tpu_custom_call.1} parent=27 // pred_check_branch
          %188 = sbr.rel (%p186) target = $region32
        $region31: #{tpu_custom_call.1} parent=27 // pred_region
          %189 = dma.done %s182, 256
        $region32: #{tpu_custom_call.1} parent=27 // pred_fallthru
          _
        %s190 = sand.u32 %s72, 1
        %s191 = scalar_lea.sflag [#allocation6], %s190
        %s192 = sand.u32 %s72, 1
        %s193 = smul.addr %s192, 2
        %s194 = scalar_lea.vmem [#allocation5], %s193
        // Predicated region
        $region33: #{tpu_custom_call.1} parent=27 // pred_check
          %p195 = pneg %p85
        $region34: #{tpu_custom_call.1} parent=27 // pred_check_branch
          %197 = sbr.rel (%p195) target = $region36
        $region35: #{tpu_custom_call.1} parent=27 // pred_region
          %198 = dma.done %s191, 32
        $region36: #{tpu_custom_call.1} parent=27 // pred_fallthru
          _
        %s199 = sand.u32 %s44, 1
        %s200 = scalar_lea.sflag [#allocation3], %s199
        %s201 = sand.u32 %s44, 1
        %s202 = smul.addr %s201, 16
        %s203 = scalar_lea.vmem [#allocation2], %s202
        %p204 = pneg %p57
        %p205 = pneg %p54
        %s206 = sand.u32 %s72, 1
        %s207 = scalar_lea.sflag [#allocation6], %s206
        %s208 = sand.u32 %s72, 1
        %s209 = smul.addr %s208, 2
        %s210 = scalar_lea.vmem [#allocation5], %s209
        %p211 = pneg %p85
        %p212 = pneg %p82
        %p213 = pneg %p113
        %p214 = pneg %p110
        %s215 = sand.u32 %s100, 1
        %s216 = scalar_lea.sflag [#allocation4], %s215
        %s217 = sand.u32 %s100, 1
        %s218 = smul.addr %s217, 2
        %s219 = scalar_lea.vmem [#allocation7], %s218
        %s220 = smul.u32 2, %s27
        %s221 = smul.u32 2, %s27
        %s222 = smul.u32 2, %s27
        %v223 = vld [vmem:[%s185] sm:$0xff]
        %v224 = vld [vmem:[%s185 + $0x8] sm:$0xff]
        %v225 = vrot.slane %v223, 4
        %v226 = vadd.f32 %v223, %v225
        %v227 = vrot.slane %v226, 2
        %v228 = vadd.f32 %v226, %v227
        %v229 = vrot.slane %v228, 1
        %v230 = vadd.f32 %v228, %v229
        %v231 = vrot.slane %v224, 4
        %v232 = vadd.f32 %v224, %v231
        %v233 = vrot.slane %v232, 2
        %v234 = vadd.f32 %v232, %v233
        %v235 = vrot.slane %v234, 1
        %v236 = vadd.f32 %v234, %v235
        %v237 = vmul.f32 %v230, 0.125
        %v238 = vmul.f32 %v236, 0.125
        %v239 = vmul.f32 %v237, 2.45025e-05
        %v240 = vmul.f32 %v238, 2.45025e-05
        %v241 = vadd.f32 %v239, 0.00021025
        %v242 = vadd.f32 %v240, 0.00021025
        %v243 = vrsqrt.pop %v241
        %v244 = vmul.f32 %v241, %v243
        %vm245 = vcmp.eq.f32.partialorder %v241, inf
        %v246 = vsel %vm245, %v241, %v244
        %vm247 = vcmp.eq.f32.partialorder %v241, 0.0
        %v248 = vand.u32 %v241, 2147483648
        %v249 = vsel %vm247, %v248, %v246
        %v250 = vrsqrt.pop %v242
        %v251 = vmul.f32 %v242, %v250
        %vm252 = vcmp.eq.f32.partialorder %v242, inf
        %v253 = vsel %vm252, %v242, %v251
        %vm254 = vcmp.eq.f32.partialorder %v242, 0.0
        %v255 = vand.u32 %v242, 2147483648
        %v256 = vsel %vm254, %v255, %v253
        %v257 = vld [vmem:[%s194] sm:$0x3]
        %v260 = vcombine.low %v249, %v256
        %v262 = vunpack.c.l.s4 1966171168
        %v263 = vunpack.c.0.s8 %v262
        %v264 = vlaneseq
        %v265 = vshrl.u32 %v264, 7
        %v266 = vsub.s32 %v263, %v265
        %v267 = vrot.slane %v260, %v266
        %v269 = vunpack.c.l.s4 1966171168
        %v270 = vunpack.c.0.s8 %v269
        %v271 = vlaneseq
        %v272 = vshrl.u32 %v271, 7
        %v273 = vsub.s32 %v270, %v272
        %v274 = vrot.slane %v267, %v273
        %v276 = vmul.f32 %v257, %v274
        %v278 = vlaneseq
        %v279 = vshrl.u32 %v278, 7
        %v280 = vsub.s32 0, %v279
        %v281 = vrot.slane %v276, %v280
        %v282 = vlaneseq
        %v283 = vshrl.u32 %v282, 7
        %v284 = vsub.s32 1, %v283
        %v285 = vrot.slane %v276, %v284
        %v288 = vadd.f32 %v237, %v281
        %v289 = vadd.f32 %v238, %v285
        %v290 = vmax.f32 %v288, 0.0
        %v291 = vmax.f32 %v289, 0.0
        %v292 = vmin.f32 %v290, 1.0
        %v293 = vmin.f32 %v291, 1.0
        %v296 = vcombine.low %v292, %v293
        %v298 = vunpack.c.l.s4 1966171168
        %v299 = vunpack.c.0.s8 %v298
        %v300 = vlaneseq
        %v301 = vshrl.u32 %v300, 7
        %v302 = vsub.s32 %v299, %v301
        %v303 = vrot.slane %v296, %v302
        %v305 = vunpack.c.l.s4 1966171168
        %v306 = vunpack.c.0.s8 %v305
        %v307 = vlaneseq
        %v308 = vshrl.u32 %v307, 7
        %v309 = vsub.s32 %v306, %v308
        %v310 = vrot.slane %v303, %v309
        %v312 = vlaneseq
        %vm313 = vcmp.ge.s32.totalorder %v312, 0
        %vm314 = vcmp.lt.s32.totalorder %v312, 256
        %vm315 = vmand %vm313, %vm314
        %316 = vst.msk [vmem:[%s219] sm:$0x3] %vm315, %v310
        %s317 = sand.u32 %s100, 1
        %s318 = scalar_lea.sflag [#allocation4], %s317
        %s319 = sand.u32 %s100, 1
        %s320 = smul.addr %s319, 2
        %s321 = scalar_lea.vmem [#allocation7], %s320
        // Predicated region
        $region37: #{tpu_custom_call.1} parent=27 // pred_check
          %p322 = pneg %p110
        $region38: #{tpu_custom_call.1} parent=27 // pred_check_branch
          %324 = sbr.rel (%p322) target = $region40
        $region39: #{tpu_custom_call.1} parent=27 // pred_region
          %s325 = smul.u32 2, %s27
          %s327 = ssub.s32 32, 32
          %328 = vsyncadd %s318, %s327
          %s329 = smul.addr %s26, 2
          %s330 = sadd.s32 %s325, %s329
          %s331 = smul.addr %s330, 16
          %s332 = scalar_lea.hbm %s2, %s331
          %s334 = sshll.u32 %s321, 4
          %s335 = int_to_ptr.vmem [resolvable:$true] %s334
          %337 = dma.vmem_to_hbm [thread:$0]  %s335, 32, %s332, %s318
        $region40: #{tpu_custom_call.1} parent=27 // pred_fallthru
          _
      $region28: #{tpu_custom_call.1} parent=5 // pred_fallthru
        _
      %p338 = scmp.le.s32.totalorder 2, %s17
      // Predicated region
      $region41: #{tpu_custom_call.1} parent=5 // pred_check
        %p339 = pneg %p338
      $region42: #{tpu_custom_call.1} parent=5 // pred_check_branch
        %341 = sbr.rel (%p339) target = $region44
      $region43: #{tpu_custom_call.1} parent=5 // pred_region
        %s342 = ssub.s32 %s17, 2
        // Predicated region
        $region45: #{tpu_custom_call.1} parent=43 // pred_check
          %p343 = pneg %p116
        $region46: #{tpu_custom_call.1} parent=43 // pred_check_branch
          %345 = sbr.rel (%p343) target = $region48
        $region47: #{tpu_custom_call.1} parent=43 // pred_region
          %s346 = sand.u32 %s101, 1
          %s347 = scalar_lea.sflag [#allocation4], %s346
          %s348 = sand.u32 %s101, 1
          %s349 = smul.addr %s348, 2
          %s350 = scalar_lea.vmem [#allocation7], %s349
          %351 = dma.done %s347, 32
        $region48: #{tpu_custom_call.1} parent=43 // pred_fallthru
          _
      $region44: #{tpu_custom_call.1} parent=5 // pred_fallthru
        _
    $region6: #{tpu_custom_call.1} parent=1 // loop_footer
      %s21 = sadd.s32 1, %s17
    $region7: #{tpu_custom_call.1} parent=1 // loop_footer_branch
      %16 = sbr.rel target = $region3
    $region8: #{tpu_custom_call.1} parent=1 // loop_exit
      _
    %352 = vsyncpa [#allocation3], 1
    %s353 = scalar_lea.sflag [#allocation3], 1
    %354 = vsyncpa %s353, 1
    %355 = vsyncpa [#allocation6], 1
    %s356 = scalar_lea.sflag [#allocation6], 1
    %357 = vsyncpa %s356, 1
    %358 = vsyncpa [#allocation4], 1
    %s359 = scalar_lea.sflag [#allocation4], 1
    %360 = vsyncpa %s359, 1

</llo_original>
